<compile_context>
chip_gen: v5e
topology: v5e:2x2
jax: 0.10.0
libtpu: 0.0.40
codegen_flags: <defaults>
</compile_context>

<pallas_src>
import functools
import math

import jax
import jax.numpy as jnp
from jax import lax
from jax.experimental import pallas as pl
from jax.experimental.pallas import tpu as pltpu

NEG_SLOPE = 0.01                 # nn.LeakyReLU default negative_slope

# hyper-params of Encoder.encoder_1 (the only branch used in forward)
K1, S1, P1, D1 = 3, 2, 1, 1      # first Conv1d
K2, S2, P2, D2 = 3, 2, 1, 4      # second (dilated) Conv1d
PK = 5                           # MaxPool1d(kernel_size=5) -> stride 5, pad 0

BASE = 8                         # leading pad rows (sublane aligned, >= P1/P2)
LANES = 128                      # vreg lane width


def _conv_out_len(L, K, S, P, D):
    return (L + 2 * P - D * (K - 1) - 1) // S + 1


def _round_up(v, m):
    return ((v + m - 1) // m) * m


def _pick_nb(n, c, min_grid_steps=1):
    """Largest divisor of n whose packed lane width Nb*c fits in 128 lanes.

    Default (min_grid_steps=1) folds as much batch as possible into a single
    grid step -- right for single-TC v5e/v6e where the grid is a serial loop.
    On dual-TC v7x pass min_grid_steps=2 so the batch splits across cores.
    """
    lane_cap = max(1, LANES // c)
    divs = [d for d in range(1, n + 1)
            if n % d == 0 and d <= lane_cap and ((d * c) % 8 == 0 or d == n)]
    if not divs:
        divs = [1]
    pref = [d for d in divs if n // d >= min_grid_steps]
    pool = pref if pref else divs
    return max(pool)


def _leaky(x):
    return jnp.where(x >= 0, x, NEG_SLOPE * x)


def _encoder1_kernel(x_ref, w1_ref, b1_ref, w2_ref, b2_ref, o_ref,
                     xpad_ref, h1_ref, pool_ref, *,
                     NbC, L, L1, L2, L3, Lp1, Lp2):
    f32 = jnp.float32

    # ---- stage input: (Nb*C, L) -> (L, Nb*C); one transpose, one store -----
    # BASE and L offsets are 8-aligned and Nb*C lanes wide -> unmasked stores;
    # only the pad rows are zero-filled (no full-buffer memset).
    x_t = jnp.transpose(x_ref[...]).astype(f32)                  # (L, Nb*C)
    xpad_ref[0:BASE, :] = jnp.zeros((BASE, NbC), f32)            # left pad
    xpad_ref[BASE:BASE + L, :] = x_t                             # data
    if Lp1 > BASE + L:                                           # right pad
        xpad_ref[BASE + L:Lp1, :] = jnp.zeros((Lp1 - BASE - L, NbC), f32)

    # ---- Conv1d #1: k=3, s=2, p=1, d=1 --------------------------------------
    # Per-tap full-width MXU dots against block-diagonal (Nb*C, Nb*C) weights.
    b1v = b1_ref[...]                                            # (1, Nb*C)
    acc1 = None
    for k in range(K1):
        xin = xpad_ref[pl.ds(BASE + k * D1 - P1, L1, S1), :]
        d = jnp.dot(xin, w1_ref[k], preferred_element_type=f32)
        acc1 = d if acc1 is None else acc1 + d
    acc1 = _leaky(acc1 + b1v)                                    # (L1, Nb*C)

    # stage conv1 output (zero-padded) for the dilated conv2 taps
    h1_ref[0:BASE, :] = jnp.zeros((BASE, NbC), f32)
    h1_ref[BASE:BASE + L1, :] = acc1
    if Lp2 > BASE + L1:
        h1_ref[BASE + L1:Lp2, :] = jnp.zeros((Lp2 - BASE - L1, NbC), f32)

    # ---- Conv1d #2: k=3, s=2, p=1, dilation=4 -------------------------------
    b2v = b2_ref[...]
    acc2 = None
    for k in range(K2):
        hin = h1_ref[pl.ds(BASE + k * D2 - P2, L2, S2), :]
        d = jnp.dot(hin, w2_ref[k], preferred_element_type=f32)
        acc2 = d if acc2 is None else acc2 + d
    acc2 = _leaky(acc2 + b2v)                                    # (L2, Nb*C)

    # ---- MaxPool1d(kernel_size=5, stride=5) ---------------------------------
    # Dedicated lane-dense scratch (no aliasing with conv staging buffers);
    # only the PK*L3 rows that the pool actually consumes are written.
    pool_ref[0:PK * L3, :] = acc2[:PK * L3, :]
    pooled = pool_ref[pl.ds(0, L3, PK), :]
    for j in range(1, PK):
        pooled = jnp.maximum(pooled, pool_ref[pl.ds(j, L3, PK), :])

    o_ref[0] = pooled.astype(o_ref.dtype)                        # (L3, Nb*C)


def encoder_forward(x, w1, b1, w2, b2, *, min_grid_steps=1):
    """x: (N, C, L) float32; w*: (C_out, C_in, K) torch layout; b*: (C,)."""
    N, C, L = x.shape
    L1 = _conv_out_len(L, K1, S1, P1, D1)
    L2 = _conv_out_len(L1, K2, S2, P2, D2)
    L3 = (L2 - PK) // PK + 1
    assert L1 > 0 and L2 > 0 and L3 > 0, "sequence too short for encoder_1"
    assert BASE >= max(P1, P2), "BASE must cover the left conv padding"

    Nb = _pick_nb(N, C, min_grid_steps=min_grid_steps)
    NbC = Nb * C
    G = N // Nb                                                   # grid steps

    # staged lengths: cover the data rows and the highest row any strided tap
    # read can touch, rounded to a multiple of 8 (sublane alignment).
    top1 = BASE + S1 * (L1 - 1) + D1 * (K1 - 1) - P1 + 1
    Lp1 = _round_up(max(BASE + L, top1), 8)
    top2 = BASE + S2 * (L2 - 1) + D2 * (K2 - 1) - P2 + 1
    Lp2 = _round_up(max(BASE + L1, top2), 8)
    Lp3 = _round_up(PK * L3, 8)

    # ---- one-time (tiny) parameter prep in the wrapper ----------------------
    # torch (C_out, C_in, K) -> per-tap (C_in, C_out), then block-diagonal
    # (Nb*C, Nb*C) so batch items packed into lanes never mix channels.
    eye = jnp.eye(Nb, dtype=jnp.float32)
    w1_t = jnp.transpose(w1, (2, 1, 0)).astype(jnp.float32)       # (K1, Ci, Co)
    w2_t = jnp.transpose(w2, (2, 1, 0)).astype(jnp.float32)       # (K2, Ci, Co)
    w1_bd = jnp.stack([jnp.kron(eye, w1_t[k]) for k in range(K1)])
    w2_bd = jnp.stack([jnp.kron(eye, w2_t[k]) for k in range(K2)])
    b1_r = jnp.tile(b1.reshape(1, C).astype(jnp.float32), (1, Nb))  # (1, Nb*C)
    b2_r = jnp.tile(b2.reshape(1, C).astype(jnp.float32), (1, Nb))

    # contiguous collapse (N, C, L) -> (N*C, L): free, no data movement.
    x2d = x.reshape(N * C, L)

    kernel = functools.partial(_encoder1_kernel, NbC=NbC, L=L,
                               L1=L1, L2=L2, L3=L3, Lp1=Lp1, Lp2=Lp2)

    out_packed = pl.pallas_call(
        kernel,
        out_shape=jax.ShapeDtypeStruct((G, L3, NbC), x.dtype),
        grid_spec=pltpu.PrefetchScalarGridSpec(
            num_scalar_prefetch=0,
            grid=(G,),
            in_specs=[
                pl.BlockSpec((NbC, L), lambda b: (b, 0)),        # packed input
                pl.BlockSpec((K1, NbC, NbC), lambda b: (0, 0, 0)),
                pl.BlockSpec((1, NbC), lambda b: (0, 0)),
                pl.BlockSpec((K2, NbC, NbC), lambda b: (0, 0, 0)),
                pl.BlockSpec((1, NbC), lambda b: (0, 0)),
            ],
            out_specs=pl.BlockSpec((1, L3, NbC), lambda b: (b, 0, 0)),
            scratch_shapes=[
                pltpu.VMEM((Lp1, NbC), jnp.float32),   # padded conv1 input
                pltpu.VMEM((Lp2, NbC), jnp.float32),   # padded conv1 output
                pltpu.VMEM((Lp3, NbC), jnp.float32),   # max-pool staging
            ],
        ),
        compiler_params=pltpu.CompilerParams(
            dimension_semantics=("parallel",),
        ),
    )(x2d, w1_bd, b1_r, w2_bd, b2_r)

    # unpack the lane-dense output: (G, L3, Nb*C) -> (N, C, L3).
    # The output is ~L/(S1*S2*PK) smaller than the input; this is cheap.
    out = out_packed.reshape(G, L3, Nb, C)
    out = jnp.transpose(out, (0, 2, 3, 1)).reshape(N, C, L3)
    return out


def encoder_reference(x, w1, b1, w2, b2):
    """Pure-JAX reference mirroring PyTorch Conv1d/LeakyReLU/MaxPool1d."""
    dn = ("NCH", "OIH", "NCH")
    y = lax.conv_general_dilated(x, w1, window_strides=(S1,),
                                 padding=[(P1, P1)], rhs_dilation=(D1,),
                                 dimension_numbers=dn) + b1[None, :, None]
    y = _leaky(y)
    y = lax.conv_general_dilated(y, w2, window_strides=(S2,),
                                 padding=[(P2, P2)], rhs_dilation=(D2,),
                                 dimension_numbers=dn) + b2[None, :, None]
    y = _leaky(y)
    N, C, L2 = y.shape
    L3 = (L2 - PK) // PK + 1
    return y[..., :PK * L3].reshape(N, C, L3, PK).max(axis=-1)


def init_params(key, C):
    """Deterministic Conv1d-style init (uniform +-1/sqrt(C_in*K))."""
    k1, k2, k3, k4 = jax.random.split(key, 4)
    bnd1 = 1.0 / math.sqrt(C * K1)
    bnd2 = 1.0 / math.sqrt(C * K2)
    w1 = jax.random.uniform(k1, (C, C, K1), jnp.float32, -bnd1, bnd1)
    b1 = jax.random.uniform(k2, (C,), jnp.float32, -bnd1, bnd1)
    w2 = jax.random.uniform(k3, (C, C, K2), jnp.float32, -bnd2, bnd2)
    b2 = jax.random.uniform(k4, (C,), jnp.float32, -bnd2, bnd2)
    return w1, b1, w2, b2


if __name__ == "__main__":
    # NOTE: seq length must be >= 29 so MaxPool1d(5) sees a non-empty input.
    # N=16, C=8 exercises the full 128-lane batch->lane packing path
    # (Nb=16 -> Nb*C = 128, single lane-dense grid step).
    N, C, L = 16, 8, 128
    key = jax.random.PRNGKey(0)
    kx, kp = jax.random.split(key)
    x = jax.random.normal(kx, (N, C, L), jnp.float32)
    w1, b1, w2, b2 = init_params(kp, C)

    out = encoder_forward(x, w1, b1, w2, b2)
    out = jax.block_until_ready(out)

    ref = encoder_reference(x, w1, b1, w2, b2)
    assert out.shape == ref.shape, (out.shape, ref.shape)
    assert jnp.allclose(out, ref, rtol=1e-4, atol=1e-5), \
        float(jnp.max(jnp.abs(out - ref)))
    print("KERNEL_OK")
</pallas_src>

<mosaic_0001>
module attributes {stable_mosaic.version = 11 : i64} {
  func.func @_encoder1_kernel(%arg0: i32, %arg1: memref<128x128xf32, #tpu.memory_space<vmem>>, %arg2: memref<3x128x128xf32, #tpu.memory_space<vmem>>, %arg3: memref<1x128xf32, #tpu.memory_space<vmem>>, %arg4: memref<3x128x128xf32, #tpu.memory_space<vmem>>, %arg5: memref<1x128xf32, #tpu.memory_space<vmem>>, %arg6: memref<1x5x128xf32, #tpu.memory_space<vmem>>, %arg7: memref<136x128xf32, #tpu.memory_space<vmem>>, %arg8: memref<72x128xf32, #tpu.memory_space<vmem>>, %arg9: memref<32x128xf32, #tpu.memory_space<vmem>>) attributes {dimension_semantics = [#tpu.dimension_semantics<parallel>], iteration_bounds = array<i64: 1>, scalar_prefetch = 0 : i64, scratch_operands = 3 : i64, tpu.core_type = #tpu.core_type<tc>, window_params = [{transform_indices = @transform_0, window_bounds = array<i64: 128, 128>}, {pipeline_mode = #tpu.pipeline_mode<synchronous>, transform_indices = @transform_1, window_bounds = array<i64: 3, 128, 128>}, {pipeline_mode = #tpu.pipeline_mode<synchronous>, transform_indices = @transform_2, window_bounds = array<i64: 1, 128>}, {pipeline_mode = #tpu.pipeline_mode<synchronous>, transform_indices = @transform_3, window_bounds = array<i64: 3, 128, 128>}, {pipeline_mode = #tpu.pipeline_mode<synchronous>, transform_indices = @transform_4, window_bounds = array<i64: 1, 128>}, {transform_indices = @transform_5, window_bounds = array<i64: 1, 5, 128>}]} {
    %c0 = arith.constant 0 : index
    %c0_0 = arith.constant 0 : index
    %0 = vector.load %arg1[%c0, %c0_0] : memref<128x128xf32, #tpu.memory_space<vmem>>, vector<128x128xf32>
    %1 = tpu.transpose %0, [1, 0] : vector<128x128xf32> -> vector<128x128xf32>
    %cst = arith.constant 0.000000e+00 : f32
    %2 = vector.broadcast %cst : f32 to vector<8x128xf32>
    %c0_1 = arith.constant 0 : index
    %c0_2 = arith.constant 0 : index
    %3 = vector.load %arg7[%c0_1, %c0_2] : memref<136x128xf32, #tpu.memory_space<vmem>>, vector<8x128xf32>
    tpu.vector_store %arg7[%c0_1, %c0_2], %2 {strides = array<i32>} : memref<136x128xf32, #tpu.memory_space<vmem>>, vector<8x128xf32>,
    %c8 = arith.constant 8 : index
    %c0_3 = arith.constant 0 : index
    %4 = vector.load %arg7[%c8, %c0_3] : memref<136x128xf32, #tpu.memory_space<vmem>>, vector<128x128xf32>
    tpu.vector_store %arg7[%c8, %c0_3], %1 {strides = array<i32>} : memref<136x128xf32, #tpu.memory_space<vmem>>, vector<128x128xf32>,
    %c0_4 = arith.constant 0 : index
    %c0_5 = arith.constant 0 : index
    %5 = vector.load %arg3[%c0_4, %c0_5] : memref<1x128xf32, #tpu.memory_space<vmem>>, vector<1x128xf32>
    %c7 = arith.constant 7 : index
    %c0_6 = arith.constant 0 : index
    %6 = tpu.strided_load %arg7[%c7, %c0_6] {strides = array<i32: 2, 1>} : memref<136x128xf32, #tpu.memory_space<vmem>>, vector<64x128xf32>
    %c0_7 = arith.constant 0 : index
    %c0_8 = arith.constant 0 : index
    %c0_9 = arith.constant 0 : index
    %7 = vector.load %arg2[%c0_7, %c0_8, %c0_9] : memref<3x128x128xf32, #tpu.memory_space<vmem>>, vector<1x128x128xf32>
    %8 = vector.shape_cast %7 : vector<1x128x128xf32> to vector<128x128xf32>
    %cst_10 = arith.constant dense<0.000000e+00> : vector<64x128xf32>
    %9 = tpu.matmul %6, %8, %cst_10 {dimension_numbers = #tpu.dot_dimension_numbers<[1], [0], [0], [1], [0, 0, 1, 1], [], []>} : vector<64x128xf32>, vector<128x128xf32>, vector<64x128xf32> -> vector<64x128xf32>
    %c8_11 = arith.constant 8 : index
    %c0_12 = arith.constant 0 : index
    %10 = tpu.strided_load %arg7[%c8_11, %c0_12] {strides = array<i32: 2, 1>} : memref<136x128xf32, #tpu.memory_space<vmem>>, vector<64x128xf32>
    %c1 = arith.constant 1 : index
    %c0_13 = arith.constant 0 : index
    %c0_14 = arith.constant 0 : index
    %11 = vector.load %arg2[%c1, %c0_13, %c0_14] : memref<3x128x128xf32, #tpu.memory_space<vmem>>, vector<1x128x128xf32>
    %12 = vector.shape_cast %11 : vector<1x128x128xf32> to vector<128x128xf32>
    %cst_15 = arith.constant dense<0.000000e+00> : vector<64x128xf32>
    %13 = tpu.matmul %10, %12, %cst_15 {dimension_numbers = #tpu.dot_dimension_numbers<[1], [0], [0], [1], [0, 0, 1, 1], [], []>} : vector<64x128xf32>, vector<128x128xf32>, vector<64x128xf32> -> vector<64x128xf32>
    %14 = arith.addf %9, %13 : vector<64x128xf32>
    %c9 = arith.constant 9 : index
    %c0_16 = arith.constant 0 : index
    %15 = tpu.strided_load %arg7[%c9, %c0_16] {strides = array<i32: 2, 1>} : memref<136x128xf32, #tpu.memory_space<vmem>>, vector<64x128xf32>
    %c2 = arith.constant 2 : index
    %c0_17 = arith.constant 0 : index
    %c0_18 = arith.constant 0 : index
    %16 = vector.load %arg2[%c2, %c0_17, %c0_18] : memref<3x128x128xf32, #tpu.memory_space<vmem>>, vector<1x128x128xf32>
    %17 = vector.shape_cast %16 : vector<1x128x128xf32> to vector<128x128xf32>
    %cst_19 = arith.constant dense<0.000000e+00> : vector<64x128xf32>
    %18 = tpu.matmul %15, %17, %cst_19 {dimension_numbers = #tpu.dot_dimension_numbers<[1], [0], [0], [1], [0, 0, 1, 1], [], []>} : vector<64x128xf32>, vector<128x128xf32>, vector<64x128xf32> -> vector<64x128xf32>
    %19 = arith.addf %14, %18 : vector<64x128xf32>
    %20 = vector.broadcast %5 : vector<1x128xf32> to vector<64x128xf32>
    %21 = arith.addf %19, %20 : vector<64x128xf32>
    %cst_20 = arith.constant 0.000000e+00 : f32
    %22 = vector.broadcast %cst_20 : f32 to vector<64x128xf32>
    %23 = arith.cmpf oge, %21, %22 : vector<64x128xf32>
    %cst_21 = arith.constant 0.00999999977 : f32
    %24 = vector.broadcast %cst_21 : f32 to vector<64x128xf32>
    %25 = arith.mulf %24, %21 : vector<64x128xf32>
    %26 = arith.select %23, %21, %25 : vector<64x128xi1>, vector<64x128xf32>
    %cst_22 = arith.constant 0.000000e+00 : f32
    %27 = vector.broadcast %cst_22 : f32 to vector<8x128xf32>
    %c0_23 = arith.constant 0 : index
    %c0_24 = arith.constant 0 : index
    %28 = vector.load %arg8[%c0_23, %c0_24] : memref<72x128xf32, #tpu.memory_space<vmem>>, vector<8x128xf32>
    tpu.vector_store %arg8[%c0_23, %c0_24], %27 {strides = array<i32>} : memref<72x128xf32, #tpu.memory_space<vmem>>, vector<8x128xf32>,
    %c8_25 = arith.constant 8 : index
    %c0_26 = arith.constant 0 : index
    %29 = vector.load %arg8[%c8_25, %c0_26] : memref<72x128xf32, #tpu.memory_space<vmem>>, vector<64x128xf32>
    tpu.vector_store %arg8[%c8_25, %c0_26], %26 {strides = array<i32>} : memref<72x128xf32, #tpu.memory_space<vmem>>, vector<64x128xf32>,
    %c0_27 = arith.constant 0 : index
    %c0_28 = arith.constant 0 : index
    %30 = vector.load %arg5[%c0_27, %c0_28] : memref<1x128xf32, #tpu.memory_space<vmem>>, vector<1x128xf32>
    %c7_29 = arith.constant 7 : index
    %c0_30 = arith.constant 0 : index
    %31 = tpu.strided_load %arg8[%c7_29, %c0_30] {strides = array<i32: 2, 1>} : memref<72x128xf32, #tpu.memory_space<vmem>>, vector<29x128xf32>
    %c0_31 = arith.constant 0 : index
    %c0_32 = arith.constant 0 : index
    %c0_33 = arith.constant 0 : index
    %32 = vector.load %arg4[%c0_31, %c0_32, %c0_33] : memref<3x128x128xf32, #tpu.memory_space<vmem>>, vector<1x128x128xf32>
    %33 = vector.shape_cast %32 : vector<1x128x128xf32> to vector<128x128xf32>
    %cst_34 = arith.constant dense<0.000000e+00> : vector<29x128xf32>
    %34 = tpu.matmul %31, %33, %cst_34 {dimension_numbers = #tpu.dot_dimension_numbers<[1], [0], [0], [1], [0, 0, 1, 1], [], []>} : vector<29x128xf32>, vector<128x128xf32>, vector<29x128xf32> -> vector<29x128xf32>
    %c11 = arith.constant 11 : index
    %c0_35 = arith.constant 0 : index
    %35 = tpu.strided_load %arg8[%c11, %c0_35] {strides = array<i32: 2, 1>} : memref<72x128xf32, #tpu.memory_space<vmem>>, vector<29x128xf32>
    %c1_36 = arith.constant 1 : index
    %c0_37 = arith.constant 0 : index
    %c0_38 = arith.constant 0 : index
    %36 = vector.load %arg4[%c1_36, %c0_37, %c0_38] : memref<3x128x128xf32, #tpu.memory_space<vmem>>, vector<1x128x128xf32>
    %37 = vector.shape_cast %36 : vector<1x128x128xf32> to vector<128x128xf32>
    %cst_39 = arith.constant dense<0.000000e+00> : vector<29x128xf32>
    %38 = tpu.matmul %35, %37, %cst_39 {dimension_numbers = #tpu.dot_dimension_numbers<[1], [0], [0], [1], [0, 0, 1, 1], [], []>} : vector<29x128xf32>, vector<128x128xf32>, vector<29x128xf32> -> vector<29x128xf32>
    %39 = arith.addf %34, %38 : vector<29x128xf32>
    %c15 = arith.constant 15 : index
    %c0_40 = arith.constant 0 : index
    %40 = tpu.strided_load %arg8[%c15, %c0_40] {strides = array<i32: 2, 1>} : memref<72x128xf32, #tpu.memory_space<vmem>>, vector<29x128xf32>
    %c2_41 = arith.constant 2 : index
    %c0_42 = arith.constant 0 : index
    %c0_43 = arith.constant 0 : index
    %41 = vector.load %arg4[%c2_41, %c0_42, %c0_43] : memref<3x128x128xf32, #tpu.memory_space<vmem>>, vector<1x128x128xf32>
    %42 = vector.shape_cast %41 : vector<1x128x128xf32> to vector<128x128xf32>
    %cst_44 = arith.constant dense<0.000000e+00> : vector<29x128xf32>
    %43 = tpu.matmul %40, %42, %cst_44 {dimension_numbers = #tpu.dot_dimension_numbers<[1], [0], [0], [1], [0, 0, 1, 1], [], []>} : vector<29x128xf32>, vector<128x128xf32>, vector<29x128xf32> -> vector<29x128xf32>
    %44 = arith.addf %39, %43 : vector<29x128xf32>
    %45 = vector.broadcast %30 : vector<1x128xf32> to vector<29x128xf32>
    %46 = arith.addf %44, %45 : vector<29x128xf32>
    %cst_45 = arith.constant 0.000000e+00 : f32
    %47 = vector.broadcast %cst_45 : f32 to vector<29x128xf32>
    %48 = arith.cmpf oge, %46, %47 : vector<29x128xf32>
    %cst_46 = arith.constant 0.00999999977 : f32
    %49 = vector.broadcast %cst_46 : f32 to vector<29x128xf32>
    %50 = arith.mulf %49, %46 : vector<29x128xf32>
    %51 = arith.select %48, %46, %50 : vector<29x128xi1>, vector<29x128xf32>
    %52 = vector.extract_strided_slice %51 {offsets = [0, 0], sizes = [25, 128], strides = [1, 1]} : vector<29x128xf32> to vector<25x128xf32>
    %c0_47 = arith.constant 0 : index
    %c0_48 = arith.constant 0 : index
    %53 = vector.load %arg9[%c0_47, %c0_48] : memref<32x128xf32, #tpu.memory_space<vmem>>, vector<25x128xf32>
    tpu.vector_store %arg9[%c0_47, %c0_48], %52 {strides = array<i32>} : memref<32x128xf32, #tpu.memory_space<vmem>>, vector<25x128xf32>,
    %c0_49 = arith.constant 0 : index
    %c0_50 = arith.constant 0 : index
    %54 = tpu.strided_load %arg9[%c0_49, %c0_50] {strides = array<i32: 5, 1>} : memref<32x128xf32, #tpu.memory_space<vmem>>, vector<5x128xf32>
    %c1_51 = arith.constant 1 : index
    %c0_52 = arith.constant 0 : index
    %55 = tpu.strided_load %arg9[%c1_51, %c0_52] {strides = array<i32: 5, 1>} : memref<32x128xf32, #tpu.memory_space<vmem>>, vector<5x128xf32>
    %56 = arith.maximumf %54, %55 : vector<5x128xf32>
    %c2_53 = arith.constant 2 : index
    %c0_54 = arith.constant 0 : index
    %57 = tpu.strided_load %arg9[%c2_53, %c0_54] {strides = array<i32: 5, 1>} : memref<32x128xf32, #tpu.memory_space<vmem>>, vector<5x128xf32>
    %58 = arith.maximumf %56, %57 : vector<5x128xf32>
    %c3 = arith.constant 3 : index
    %c0_55 = arith.constant 0 : index
    %59 = tpu.strided_load %arg9[%c3, %c0_55] {strides = array<i32: 5, 1>} : memref<32x128xf32, #tpu.memory_space<vmem>>, vector<5x128xf32>
    %60 = arith.maximumf %58, %59 : vector<5x128xf32>
    %c4 = arith.constant 4 : index
    %c0_56 = arith.constant 0 : index
    %61 = tpu.strided_load %arg9[%c4, %c0_56] {strides = array<i32: 5, 1>} : memref<32x128xf32, #tpu.memory_space<vmem>>, vector<5x128xf32>
    %62 = arith.maximumf %60, %61 : vector<5x128xf32>
    %c0_57 = arith.constant 0 : index
    %c0_58 = arith.constant 0 : index
    %c0_59 = arith.constant 0 : index
    %63 = vector.load %arg6[%c0_57, %c0_58, %c0_59] : memref<1x5x128xf32, #tpu.memory_space<vmem>>, vector<1x5x128xf32>
    %64 = vector.shape_cast %63 : vector<1x5x128xf32> to vector<5x128xf32>
    %65 = vector.shape_cast %62 : vector<5x128xf32> to vector<1x5x128xf32>
    tpu.vector_store %arg6[%c0_57, %c0_58, %c0_59], %65 {strides = array<i32>} : memref<1x5x128xf32, #tpu.memory_space<vmem>>, vector<1x5x128xf32>,
    return
  }
  func.func @transform_0(%arg0: i32) -> (i32, i32) {
    %c0_i32 = arith.constant 0 : i32
    %c0_i32_0 = arith.constant 0 : i32
    return %arg0, %c0_i32 : i32, i32
  }
  func.func @transform_1(%arg0: i32) -> (i32, i32, i32) {
    %c0_i32 = arith.constant 0 : i32
    %c0_i32_0 = arith.constant 0 : i32
    %c0_i32_1 = arith.constant 0 : i32
    %c0_i32_2 = arith.constant 0 : i32
    return %c0_i32, %c0_i32_0, %c0_i32_1 : i32, i32, i32
  }
  func.func @transform_2(%arg0: i32) -> (i32, i32) {
    %c0_i32 = arith.constant 0 : i32
    %c0_i32_0 = arith.constant 0 : i32
    %c0_i32_1 = arith.constant 0 : i32
    return %c0_i32, %c0_i32_0 : i32, i32
  }
  func.func @transform_3(%arg0: i32) -> (i32, i32, i32) {
    %c0_i32 = arith.constant 0 : i32
    %c0_i32_0 = arith.constant 0 : i32
    %c0_i32_1 = arith.constant 0 : i32
    %c0_i32_2 = arith.constant 0 : i32
    return %c0_i32, %c0_i32_0, %c0_i32_1 : i32, i32, i32
  }
  func.func @transform_4(%arg0: i32) -> (i32, i32) {
    %c0_i32 = arith.constant 0 : i32
    %c0_i32_0 = arith.constant 0 : i32
    %c0_i32_1 = arith.constant 0 : i32
    return %c0_i32, %c0_i32_0 : i32, i32
  }
  func.func @transform_5(%arg0: i32) -> (i32, i32, i32) {
    %c0_i32 = arith.constant 0 : i32
    %c0_i32_0 = arith.constant 0 : i32
    %c0_i32_1 = arith.constant 0 : i32
    return %arg0, %c0_i32, %c0_i32_0 : i32, i32, i32
  }
}

</mosaic_0001>

<llo_original>
// kernel: tpu_custom_call.1
$region0: #{tpu_custom_call.1}
  #allocation0 [shape = 'u32[]', space=smem, size = 0x4, offset = 0x4, fixed_abs, tag = 'smem constant byte address 0x4 - core index']
  #allocation1 [shape = 'u32[72,128]{1,0:T(1,128)}', space=vmem, size = 0x9000, scoped, tag = 'internal scratch']
  #allocation2 [shape = 'f32[136,128]{1,0:T(8,128)}', space=vmem, size = 0x11000, scoped, tag = 'scratch operand']
  #allocation3 [shape = 'f32[72,128]{1,0:T(8,128)}', space=vmem, size = 0x9000, scoped, tag = 'scratch operand']
  #allocation4 [shape = 'f32[32,128]{1,0:T(8,128)}', space=vmem, size = 0x4000, scoped, tag = 'scratch operand']
  %s0 = inlined_call_operand.hbm [shape: f32[128,128], index: 0, kind: input, shape index: {}]
  %s1 = inlined_call_operand.hbm [shape: f32[3,128,128], index: 1, kind: input, shape index: {}]
  %s2 = inlined_call_operand.vmem [shape: f32[1,128], index: 2, kind: input, shape index: {}]
  %s3 = inlined_call_operand.hbm [shape: f32[3,128,128], index: 3, kind: input, shape index: {}]
  %s4 = inlined_call_operand.vmem [shape: f32[1,128], index: 4, kind: input, shape index: {}]
  %s5 = inlined_call_operand.vmem [shape: f32[1,5,128], index: 5, kind: output, shape index: {}]
  %s6 = sld [smem:[#allocation0]]
  $region42: #{tpu_custom_call.1} parent=0
    _
  %s8 = ssub.s32 1, %s6
  %s9 = scalar_select 0, %s8, %s6
  $region1: #{tpu_custom_call.1} parent=0
    #allocation5 [shape = 'u8[65536]{0}', space=vmem, size = 0x10000, scoped, tag = 'input window, operand 0, single buffered']
    #allocation6 [shape = 's32[1]{0}', space=sflag, size = 0x4, scoped, tag = 'scoped memory for tpu_custom_call.1']
    #allocation7 [shape = 'u8[196608]{0}', space=vmem, size = 0x30000, scoped, tag = 'input window, operand 1, single buffered']
    #allocation8 [shape = 's32[1]{0}', space=sflag, size = 0x4, scoped, tag = 'scoped memory for tpu_custom_call.1']
    #allocation9 [shape = 'u8[196608]{0}', space=vmem, size = 0x30000, scoped, tag = 'input window, operand 3, single buffered']
    %10 = vsyncpa [#allocation6], 0
    %11 = vsyncpa [#allocation8], 0
    // Predicated region
    $region2: #{tpu_custom_call.1} parent=1 // pred_check
      _
    $region3: #{tpu_custom_call.1} parent=1 // pred_check_branch
      %13 = sbr.rel (0) target = $region5
    $region4: #{tpu_custom_call.1} parent=1 // pred_region
      %15 = vsyncadd [#allocation6], 0
      %s16 = sshll.u32 %s0, 4
      %s17 = int_to_ptr.hbm [resolvable:$true] %s16
      %s18 = sshll.u32 [#allocation5], 4
      %s19 = int_to_ptr.vmem [resolvable:$true] %s18
      %24 = dma.hbm_to_vmem [thread:$0]  %s17, 2048, %s19, [#allocation6], 128, 128, 8
    $region5: #{tpu_custom_call.1} parent=1 // pred_fallthru
      _
    // Predicated region
    $region6: #{tpu_custom_call.1} parent=1 // pred_check
      _
    $region7: #{tpu_custom_call.1} parent=1 // pred_check_branch
      %26 = sbr.rel (0) target = $region9
    $region8: #{tpu_custom_call.1} parent=1 // pred_region
      %28 = vsyncadd [#allocation8], 0
      %s29 = sshll.u32 %s1, 4
      %s30 = int_to_ptr.hbm [resolvable:$true] %s29
      %s31 = sshll.u32 [#allocation7], 4
      %s32 = int_to_ptr.vmem [resolvable:$true] %s31
      %37 = dma.hbm_to_vmem [thread:$0]  %s30, 6144, %s32, [#allocation8], 128, 128, 8
    $region9: #{tpu_custom_call.1} parent=1 // pred_fallthru
      _
    // Predicated region
    $region10: #{tpu_custom_call.1} parent=1 // pred_check
      _
    $region11: #{tpu_custom_call.1} parent=1 // pred_check_branch
      %39 = sbr.rel (0) target = $region13
    $region12: #{tpu_custom_call.1} parent=1 // pred_region
      _
    $region13: #{tpu_custom_call.1} parent=1 // pred_fallthru
      _
    // Predicated region
    $region14: #{tpu_custom_call.1} parent=1 // pred_check
      _
    $region15: #{tpu_custom_call.1} parent=1 // pred_check_branch
      %41 = sbr.rel (0) target = $region17
    $region16: #{tpu_custom_call.1} parent=1 // pred_region
      %43 = vsyncadd [#allocation8], 0
      %s44 = sshll.u32 %s3, 4
      %s45 = int_to_ptr.hbm [resolvable:$true] %s44
      %s46 = sshll.u32 [#allocation9], 4
      %s47 = int_to_ptr.vmem [resolvable:$true] %s46
      %52 = dma.hbm_to_vmem [thread:$0]  %s45, 6144, %s47, [#allocation8], 128, 128, 8
    $region17: #{tpu_custom_call.1} parent=1 // pred_fallthru
      _
    // Predicated region
    $region18: #{tpu_custom_call.1} parent=1 // pred_check
      _
    $region19: #{tpu_custom_call.1} parent=1 // pred_check_branch
      %54 = sbr.rel (0) target = $region21
    $region20: #{tpu_custom_call.1} parent=1 // pred_region
      _
    $region21: #{tpu_custom_call.1} parent=1 // pred_fallthru
      _
    // Predicated region
    $region22: #{tpu_custom_call.1} parent=1 // pred_check
      _
    $region23: #{tpu_custom_call.1} parent=1 // pred_check_branch
      %56 = sbr.rel (0) target = $region25
    $region24: #{tpu_custom_call.1} parent=1 // pred_region
      %58 = dma.done [#allocation6], 2048
    $region25: #{tpu_custom_call.1} parent=1 // pred_fallthru
      _
    // Predicated region
    $region26: #{tpu_custom_call.1} parent=1 // pred_check
      _
    $region27: #{tpu_custom_call.1} parent=1 // pred_check_branch
      %60 = sbr.rel (0) target = $region29
    $region28: #{tpu_custom_call.1} parent=1 // pred_region
      %62 = dma.done [#allocation8], 6144
    $region29: #{tpu_custom_call.1} parent=1 // pred_fallthru
      _
    // Predicated region
    $region30: #{tpu_custom_call.1} parent=1 // pred_check
      _
    $region31: #{tpu_custom_call.1} parent=1 // pred_check_branch
      %64 = sbr.rel (0) target = $region33
    $region32: #{tpu_custom_call.1} parent=1 // pred_region
      %66 = dma.done [#allocation8], 6144
    $region33: #{tpu_custom_call.1} parent=1 // pred_fallthru
      _
    %v67 = vld [vmem:[#allocation5] sm:$0xff]
    %v68 = vld [vmem:[#allocation5 + $0x8] sm:$0xff]
    %v69 = vld [vmem:[#allocation5 + $0x10] sm:$0xff]
    %v70 = vld [vmem:[#allocation5 + $0x18] sm:$0xff]
    %v71 = vld [vmem:[#allocation5 + $0x20] sm:$0xff]
    %v72 = vld [vmem:[#allocation5 + $0x28] sm:$0xff]
    %v73 = vld [vmem:[#allocation5 + $0x30] sm:$0xff]
    %v74 = vld [vmem:[#allocation5 + $0x38] sm:$0xff]
    %v75 = vld [vmem:[#allocation5 + $0x40] sm:$0xff]
    %v76 = vld [vmem:[#allocation5 + $0x48] sm:$0xff]
    %v77 = vld [vmem:[#allocation5 + $0x50] sm:$0xff]
    %v78 = vld [vmem:[#allocation5 + $0x58] sm:$0xff]
    %v79 = vld [vmem:[#allocation5 + $0x60] sm:$0xff]
    %v80 = vld [vmem:[#allocation5 + $0x68] sm:$0xff]
    %v81 = vld [vmem:[#allocation5 + $0x70] sm:$0xff]
    %v82 = vld [vmem:[#allocation5 + $0x78] sm:$0xff]
    %83 = vxpose.xlu0.b32.start [1/16] %v67, 128
    %84 = vxpose.xlu0.b32.cont [2/16] %v68, 128
    %85 = vxpose.xlu0.b32.cont [3/16] %v69, 128
    %86 = vxpose.xlu0.b32.cont [4/16] %v70, 128
    %87 = vxpose.xlu0.b32.cont [5/16] %v71, 128
    %88 = vxpose.xlu0.b32.cont [6/16] %v72, 128
    %89 = vxpose.xlu0.b32.cont [7/16] %v73, 128
    %90 = vxpose.xlu0.b32.cont [8/16] %v74, 128
    %91 = vxpose.xlu0.b32.cont [9/16] %v75, 128
    %92 = vxpose.xlu0.b32.cont [10/16] %v76, 128
    %93 = vxpose.xlu0.b32.cont [11/16] %v77, 128
    %94 = vxpose.xlu0.b32.cont [12/16] %v78, 128
    %95 = vxpose.xlu0.b32.cont [13/16] %v79, 128
    %96 = vxpose.xlu0.b32.cont [14/16] %v80, 128
    %97 = vxpose.xlu0.b32.cont [15/16] %v81, 128
    %98 = vxpose.xlu0.b32.end [16/16] %v82, 128
    %v99 = vpop.trf.xlu0
    %v100 = vpop.trf.xlu0
    %v101 = vpop.trf.xlu0
    %v102 = vpop.trf.xlu0
    %v103 = vpop.trf.xlu0
    %v104 = vpop.trf.xlu0
    %v105 = vpop.trf.xlu0
    %v106 = vpop.trf.xlu0
    %v107 = vpop.trf.xlu0
    %v108 = vpop.trf.xlu0
    %v109 = vpop.trf.xlu0
    %v110 = vpop.trf.xlu0
    %v111 = vpop.trf.xlu0
    %v112 = vpop.trf.xlu0
    %v113 = vpop.trf.xlu0
    %v114 = vpop.trf.xlu0
    %115 = vst [vmem:[#allocation2] sm:$0xff] 0.0
    %116 = vst [vmem:[#allocation2 + $0x8] sm:$0xff] %v99
    %117 = vst [vmem:[#allocation2 + $0x10] sm:$0xff] %v100
    %118 = vst [vmem:[#allocation2 + $0x18] sm:$0xff] %v101
    %119 = vst [vmem:[#allocation2 + $0x20] sm:$0xff] %v102
    %120 = vst [vmem:[#allocation2 + $0x28] sm:$0xff] %v103
    %121 = vst [vmem:[#allocation2 + $0x30] sm:$0xff] %v104
    %122 = vst [vmem:[#allocation2 + $0x38] sm:$0xff] %v105
    %123 = vst [vmem:[#allocation2 + $0x40] sm:$0xff] %v106
    %124 = vst [vmem:[#allocation2 + $0x48] sm:$0xff] %v107
    %125 = vst [vmem:[#allocation2 + $0x50] sm:$0xff] %v108
    %126 = vst [vmem:[#allocation2 + $0x58] sm:$0xff] %v109
    %127 = vst [vmem:[#allocation2 + $0x60] sm:$0xff] %v110
    %128 = vst [vmem:[#allocation2 + $0x68] sm:$0xff] %v111
    %129 = vst [vmem:[#allocation2 + $0x70] sm:$0xff] %v112
    %130 = vst [vmem:[#allocation2 + $0x78] sm:$0xff] %v113
    %131 = vst [vmem:[#allocation2 + $0x80] sm:$0xff] %v114
    %v132 = vld [vmem:[%s2] sm:$0x1]
    %s133 = scalar_lea.vmem [#allocation2], 7
    %v134 = vld [vmem:[%s133] ss:$2 sm:$0xff]
    %s135 = scalar_lea.vmem [#allocation2], 23
    %v136 = vld [vmem:[%s135] ss:$2 sm:$0xff]
    %s137 = scalar_lea.vmem [#allocation2], 39
    %v138 = vld [vmem:[%s137] ss:$2 sm:$0xff]
    %s139 = scalar_lea.vmem [#allocation2], 55
    %v140 = vld [vmem:[%s139] ss:$2 sm:$0xff]
    %s141 = scalar_lea.vmem [#allocation2], 71
    %v142 = vld [vmem:[%s141] ss:$2 sm:$0xff]
    %s143 = scalar_lea.vmem [#allocation2], 87
    %v144 = vld [vmem:[%s143] ss:$2 sm:$0xff]
    %s145 = scalar_lea.vmem [#allocation2], 103
    %v146 = vld [vmem:[%s145] ss:$2 sm:$0xff]
    %s147 = scalar_lea.vmem [#allocation2], 119
    %v148 = vld [vmem:[%s147] ss:$2 sm:$0xff]
    %v149 = vld [vmem:[#allocation7] sm:$0xff]
    %v150 = vld [vmem:[#allocation7 + $0x8] sm:$0xff]
    %v151 = vld [vmem:[#allocation7 + $0x10] sm:$0xff]
    %v152 = vld [vmem:[#allocation7 + $0x18] sm:$0xff]
    %v153 = vld [vmem:[#allocation7 + $0x20] sm:$0xff]
    %v154 = vld [vmem:[#allocation7 + $0x28] sm:$0xff]
    %v155 = vld [vmem:[#allocation7 + $0x30] sm:$0xff]
    %v156 = vld [vmem:[#allocation7 + $0x38] sm:$0xff]
    %v157 = vld [vmem:[#allocation7 + $0x40] sm:$0xff]
    %v158 = vld [vmem:[#allocation7 + $0x48] sm:$0xff]
    %v159 = vld [vmem:[#allocation7 + $0x50] sm:$0xff]
    %v160 = vld [vmem:[#allocation7 + $0x58] sm:$0xff]
    %v161 = vld [vmem:[#allocation7 + $0x60] sm:$0xff]
    %v162 = vld [vmem:[#allocation7 + $0x68] sm:$0xff]
    %v163 = vld [vmem:[#allocation7 + $0x70] sm:$0xff]
    %v164 = vld [vmem:[#allocation7 + $0x78] sm:$0xff]
    %s165 = scalar_lea.vmem [#allocation2], 8
    %v166 = vld [vmem:[%s165] ss:$2 sm:$0xff]
    %s167 = scalar_lea.vmem [#allocation2], 24
    %v168 = vld [vmem:[%s167] ss:$2 sm:$0xff]
    %s169 = scalar_lea.vmem [#allocation2], 40
    %v170 = vld [vmem:[%s169] ss:$2 sm:$0xff]
    %s171 = scalar_lea.vmem [#allocation2], 56
    %v172 = vld [vmem:[%s171] ss:$2 sm:$0xff]
    %s173 = scalar_lea.vmem [#allocation2], 72
    %v174 = vld [vmem:[%s173] ss:$2 sm:$0xff]
    %s175 = scalar_lea.vmem [#allocation2], 88
    %v176 = vld [vmem:[%s175] ss:$2 sm:$0xff]
    %s177 = scalar_lea.vmem [#allocation2], 104
    %v178 = vld [vmem:[%s177] ss:$2 sm:$0xff]
    %s179 = scalar_lea.vmem [#allocation2], 120
    %v180 = vld [vmem:[%s179] ss:$2 sm:$0xff]
    %s181 = scalar_lea.vmem [#allocation7], 128
    %v182 = vld [vmem:[%s181] sm:$0xff]
    %v183 = vld [vmem:[%s181 + $0x8] sm:$0xff]
    %v184 = vld [vmem:[%s181 + $0x10] sm:$0xff]
    %v185 = vld [vmem:[%s181 + $0x18] sm:$0xff]
    %v186 = vld [vmem:[%s181 + $0x20] sm:$0xff]
    %v187 = vld [vmem:[%s181 + $0x28] sm:$0xff]
    %v188 = vld [vmem:[%s181 + $0x30] sm:$0xff]
    %v189 = vld [vmem:[%s181 + $0x38] sm:$0xff]
    %v190 = vld [vmem:[%s181 + $0x40] sm:$0xff]
    %v191 = vld [vmem:[%s181 + $0x48] sm:$0xff]
    %v192 = vld [vmem:[%s181 + $0x50] sm:$0xff]
    %v193 = vld [vmem:[%s181 + $0x58] sm:$0xff]
    %v194 = vld [vmem:[%s181 + $0x60] sm:$0xff]
    %v195 = vld [vmem:[%s181 + $0x68] sm:$0xff]
    %v196 = vld [vmem:[%s181 + $0x70] sm:$0xff]
    %v197 = vld [vmem:[%s181 + $0x78] sm:$0xff]
    %198 = vmatpush.msra.mxu0 %v197
    %199 = vmatpush.msra.mxu0 %v196
    %200 = vmatpush.msra.mxu0 %v195
    %201 = vmatpush.msra.mxu0 %v194
    %202 = vmatpush.msra.mxu0 %v193
    %203 = vmatpush.msra.mxu0 %v192
    %204 = vmatpush.msra.mxu0 %v191
    %205 = vmatpush.msra.mxu0 %v190
    %206 = vmatpush.msra.mxu0 %v189
    %207 = vmatpush.msra.mxu0 %v188
    %208 = vmatpush.msra.mxu0 %v187
    %209 = vmatpush.msra.mxu0 %v186
    %210 = vmatpush.msra.mxu0 %v185
    %211 = vmatpush.msra.mxu0 %v184
    %212 = vmatpush.msra.mxu0 %v183
    %213 = vmatpush.msra.mxu0 %v182
    %214 = vmatmul.f32.gmra.mxu0 %v166
    %v215 = vpop.f32.mrf.mxu0
    %v216 = vadd.f32 0.0, %v215
    %217 = vmatmul.f32.gmra.mxu0 %v168
    %v218 = vpop.f32.mrf.mxu0
    %v219 = vadd.f32 0.0, %v218
    %220 = vmatmul.f32.gmra.mxu0 %v170
    %v221 = vpop.f32.mrf.mxu0
    %v222 = vadd.f32 0.0, %v221
    %223 = vmatmul.f32.gmra.mxu0 %v172
    %v224 = vpop.f32.mrf.mxu0
    %v225 = vadd.f32 0.0, %v224
    %226 = vmatmul.f32.gmra.mxu0 %v174
    %v227 = vpop.f32.mrf.mxu0
    %v228 = vadd.f32 0.0, %v227
    %229 = vmatmul.f32.gmra.mxu0 %v176
    %v230 = vpop.f32.mrf.mxu0
    %v231 = vadd.f32 0.0, %v230
    %232 = vmatmul.f32.gmra.mxu0 %v178
    %v233 = vpop.f32.mrf.mxu0
    %v234 = vadd.f32 0.0, %v233
    %235 = vmatmul.f32.gmra.mxu0 %v180
    %v236 = vpop.f32.mrf.mxu0
    %v237 = vadd.f32 0.0, %v236
    %238 = vdwg.mxu0
    %239 = vmatpush.msra.mxu0 %v164
    %240 = vmatpush.msra.mxu0 %v163
    %241 = vmatpush.msra.mxu0 %v162
    %242 = vmatpush.msra.mxu0 %v161
    %243 = vmatpush.msra.mxu0 %v160
    %244 = vmatpush.msra.mxu0 %v159
    %245 = vmatpush.msra.mxu0 %v158
    %246 = vmatpush.msra.mxu0 %v157
    %247 = vmatpush.msra.mxu0 %v156
    %248 = vmatpush.msra.mxu0 %v155
    %249 = vmatpush.msra.mxu0 %v154
    %250 = vmatpush.msra.mxu0 %v153
    %251 = vmatpush.msra.mxu0 %v152
    %252 = vmatpush.msra.mxu0 %v151
    %253 = vmatpush.msra.mxu0 %v150
    %254 = vmatpush.msra.mxu0 %v149
    %255 = vmatmul.f32.gmra.mxu0 %v134
    %v256 = vpop.f32.mrf.mxu0
    %v257 = vadd.f32 %v216, %v256
    %258 = vmatmul.f32.gmra.mxu0 %v136
    %v259 = vpop.f32.mrf.mxu0
    %v260 = vadd.f32 %v219, %v259
    %261 = vmatmul.f32.gmra.mxu0 %v138
    %v262 = vpop.f32.mrf.mxu0
    %v263 = vadd.f32 %v222, %v262
    %264 = vmatmul.f32.gmra.mxu0 %v140
    %v265 = vpop.f32.mrf.mxu0
    %v266 = vadd.f32 %v225, %v265
    %267 = vmatmul.f32.gmra.mxu0 %v142
    %v268 = vpop.f32.mrf.mxu0
    %v269 = vadd.f32 %v228, %v268
    %270 = vmatmul.f32.gmra.mxu0 %v144
    %v271 = vpop.f32.mrf.mxu0
    %v272 = vadd.f32 %v231, %v271
    %273 = vmatmul.f32.gmra.mxu0 %v146
    %v274 = vpop.f32.mrf.mxu0
    %v275 = vadd.f32 %v234, %v274
    %276 = vmatmul.f32.gmra.mxu0 %v148
    %v277 = vpop.f32.mrf.mxu0
    %v278 = vadd.f32 %v237, %v277
    %279 = vdwg.mxu0
    %s280 = scalar_lea.vmem [#allocation2], 9
    %v281 = vld [vmem:[%s280] ss:$2 sm:$0xff]
    %s282 = scalar_lea.vmem [#allocation2], 25
    %v283 = vld [vmem:[%s282] ss:$2 sm:$0xff]
    %s284 = scalar_lea.vmem [#allocation2], 41
    %v285 = vld [vmem:[%s284] ss:$2 sm:$0xff]
    %s286 = scalar_lea.vmem [#allocation2], 57
    %v287 = vld [vmem:[%s286] ss:$2 sm:$0xff]
    %s288 = scalar_lea.vmem [#allocation2], 73
    %v289 = vld [vmem:[%s288] ss:$2 sm:$0xff]
    %s290 = scalar_lea.vmem [#allocation2], 89
    %v291 = vld [vmem:[%s290] ss:$2 sm:$0xff]
    %s292 = scalar_lea.vmem [#allocation2], 105
    %v293 = vld [vmem:[%s292] ss:$2 sm:$0xff]
    %s294 = scalar_lea.vmem [#allocation2], 121
    %v295 = vld [vmem:[%s294] ss:$2 sm:$0xff]
    %s296 = scalar_lea.vmem [#allocation7], 256
    %v297 = vld [vmem:[%s296] sm:$0xff]
    %v298 = vld [vmem:[%s296 + $0x8] sm:$0xff]
    %v299 = vld [vmem:[%s296 + $0x10] sm:$0xff]
    %v300 = vld [vmem:[%s296 + $0x18] sm:$0xff]
    %v301 = vld [vmem:[%s296 + $0x20] sm:$0xff]
    %v302 = vld [vmem:[%s296 + $0x28] sm:$0xff]
    %v303 = vld [vmem:[%s296 + $0x30] sm:$0xff]
    %v304 = vld [vmem:[%s296 + $0x38] sm:$0xff]
    %v305 = vld [vmem:[%s296 + $0x40] sm:$0xff]
    %v306 = vld [vmem:[%s296 + $0x48] sm:$0xff]
    %v307 = vld [vmem:[%s296 + $0x50] sm:$0xff]
    %v308 = vld [vmem:[%s296 + $0x58] sm:$0xff]
    %v309 = vld [vmem:[%s296 + $0x60] sm:$0xff]
    %v310 = vld [vmem:[%s296 + $0x68] sm:$0xff]
    %v311 = vld [vmem:[%s296 + $0x70] sm:$0xff]
    %v312 = vld [vmem:[%s296 + $0x78] sm:$0xff]
    %313 = vmatpush.msra.mxu0 %v312
    %314 = vmatpush.msra.mxu0 %v311
    %315 = vmatpush.msra.mxu0 %v310
    %316 = vmatpush.msra.mxu0 %v309
    %317 = vmatpush.msra.mxu0 %v308
    %318 = vmatpush.msra.mxu0 %v307
    %319 = vmatpush.msra.mxu0 %v306
    %320 = vmatpush.msra.mxu0 %v305
    %321 = vmatpush.msra.mxu0 %v304
    %322 = vmatpush.msra.mxu0 %v303
    %323 = vmatpush.msra.mxu0 %v302
    %324 = vmatpush.msra.mxu0 %v301
    %325 = vmatpush.msra.mxu0 %v300
    %326 = vmatpush.msra.mxu0 %v299
    %327 = vmatpush.msra.mxu0 %v298
    %328 = vmatpush.msra.mxu0 %v297
    %329 = vmatmul.f32.gmra.mxu0 %v281
    %v330 = vpop.f32.mrf.mxu0
    %v331 = vadd.f32 0.0, %v330
    %332 = vmatmul.f32.gmra.mxu0 %v283
    %v333 = vpop.f32.mrf.mxu0
    %v334 = vadd.f32 0.0, %v333
    %335 = vmatmul.f32.gmra.mxu0 %v285
    %v336 = vpop.f32.mrf.mxu0
    %v337 = vadd.f32 0.0, %v336
    %338 = vmatmul.f32.gmra.mxu0 %v287
    %v339 = vpop.f32.mrf.mxu0
    %v340 = vadd.f32 0.0, %v339
    %341 = vmatmul.f32.gmra.mxu0 %v289
    %v342 = vpop.f32.mrf.mxu0
    %v343 = vadd.f32 0.0, %v342
    %344 = vmatmul.f32.gmra.mxu0 %v291
    %v345 = vpop.f32.mrf.mxu0
    %v346 = vadd.f32 0.0, %v345
    %347 = vmatmul.f32.gmra.mxu0 %v293
    %v348 = vpop.f32.mrf.mxu0
    %v349 = vadd.f32 0.0, %v348
    %350 = vmatmul.f32.gmra.mxu0 %v295
    %v351 = vpop.f32.mrf.mxu0
    %v352 = vadd.f32 0.0, %v351
    %353 = vdwg.mxu0
    %v354 = vadd.f32 %v257, %v331
    %v355 = vadd.f32 %v260, %v334
    %v356 = vadd.f32 %v263, %v337
    %v357 = vadd.f32 %v266, %v340
    %v358 = vadd.f32 %v269, %v343
    %v359 = vadd.f32 %v272, %v346
    %v360 = vadd.f32 %v275, %v349
    %v361 = vadd.f32 %v278, %v352
    %v363 = vperm.slane %v132, 0
    %v365 = vadd.f32 %v354, %v363
    %v366 = vadd.f32 %v355, %v363
    %v367 = vadd.f32 %v356, %v363
    %v368 = vadd.f32 %v357, %v363
    %v369 = vadd.f32 %v358, %v363
    %v370 = vadd.f32 %v359, %v363
    %v371 = vadd.f32 %v360, %v363
    %v372 = vadd.f32 %v361, %v363
    %vm373 = vcmp.ge.f32.partialorder %v365, 0.0
    %vm374 = vcmp.ge.f32.partialorder %v366, 0.0
    %vm375 = vcmp.ge.f32.partialorder %v367, 0.0
    %vm376 = vcmp.ge.f32.partialorder %v368, 0.0
    %vm377 = vcmp.ge.f32.partialorder %v369, 0.0
    %vm378 = vcmp.ge.f32.partialorder %v370, 0.0
    %vm379 = vcmp.ge.f32.partialorder %v371, 0.0
    %vm380 = vcmp.ge.f32.partialorder %v372, 0.0
    %v381 = vmul.f32 %v365, 0.01
    %v382 = vmul.f32 %v366, 0.01
    %v383 = vmul.f32 %v367, 0.01
    %v384 = vmul.f32 %v368, 0.01
    %v385 = vmul.f32 %v369, 0.01
    %v386 = vmul.f32 %v370, 0.01
    %v387 = vmul.f32 %v371, 0.01
    %v388 = vmul.f32 %v372, 0.01
    %v389 = vsel %vm373, %v365, %v381
    %v390 = vsel %vm374, %v366, %v382
    %v391 = vsel %vm375, %v367, %v383
    %v392 = vsel %vm376, %v368, %v384
    %v393 = vsel %vm377, %v369, %v385
    %v394 = vsel %vm378, %v370, %v386
    %v395 = vsel %vm379, %v371, %v387
    %v396 = vsel %vm380, %v372, %v388
    %397 = vst [vmem:[#allocation3] sm:$0xff] 0.0
    %398 = vst [vmem:[#allocation3 + $0x8] sm:$0xff] %v389
    %399 = vst [vmem:[#allocation3 + $0x10] sm:$0xff] %v390
    %400 = vst [vmem:[#allocation3 + $0x18] sm:$0xff] %v391
    %401 = vst [vmem:[#allocation3 + $0x20] sm:$0xff] %v392
    %402 = vst [vmem:[#allocation3 + $0x28] sm:$0xff] %v393
    %403 = vst [vmem:[#allocation3 + $0x30] sm:$0xff] %v394
    %404 = vst [vmem:[#allocation3 + $0x38] sm:$0xff] %v395
    %405 = vst [vmem:[#allocation3 + $0x40] sm:$0xff] %v396
    %v406 = vld [vmem:[%s4] sm:$0x1]
    %s407 = scalar_lea.vmem [#allocation3], 7
    %v408 = vld [vmem:[%s407] ss:$2 sm:$0xff]
    %s409 = scalar_lea.vmem [#allocation3], 23
    %v410 = vld [vmem:[%s409] ss:$2 sm:$0xff]
    %s411 = scalar_lea.vmem [#allocation3], 39
    %v412 = vld [vmem:[%s411] ss:$2 sm:$0xff]
    %s413 = scalar_lea.vmem [#allocation3], 55
    %v414 = vld [vmem:[%s413] ss:$2 sm:$0x1f]
    %v415 = vld [vmem:[#allocation9] sm:$0xff]
    %v416 = vld [vmem:[#allocation9 + $0x8] sm:$0xff]
    %v417 = vld [vmem:[#allocation9 + $0x10] sm:$0xff]
    %v418 = vld [vmem:[#allocation9 + $0x18] sm:$0xff]
    %v419 = vld [vmem:[#allocation9 + $0x20] sm:$0xff]
    %v420 = vld [vmem:[#allocation9 + $0x28] sm:$0xff]
    %v421 = vld [vmem:[#allocation9 + $0x30] sm:$0xff]
    %v422 = vld [vmem:[#allocation9 + $0x38] sm:$0xff]
    %v423 = vld [vmem:[#allocation9 + $0x40] sm:$0xff]
    %v424 = vld [vmem:[#allocation9 + $0x48] sm:$0xff]
    %v425 = vld [vmem:[#allocation9 + $0x50] sm:$0xff]
    %v426 = vld [vmem:[#allocation9 + $0x58] sm:$0xff]
    %v427 = vld [vmem:[#allocation9 + $0x60] sm:$0xff]
    %v428 = vld [vmem:[#allocation9 + $0x68] sm:$0xff]
    %v429 = vld [vmem:[#allocation9 + $0x70] sm:$0xff]
    %v430 = vld [vmem:[#allocation9 + $0x78] sm:$0xff]
    %s431 = scalar_lea.vmem [#allocation3], 11
    %v432 = vld [vmem:[%s431] ss:$2 sm:$0xff]
    %s433 = scalar_lea.vmem [#allocation3], 27
    %v434 = vld [vmem:[%s433] ss:$2 sm:$0xff]
    %s435 = scalar_lea.vmem [#allocation3], 43
    %v436 = vld [vmem:[%s435] ss:$2 sm:$0xff]
    %s437 = scalar_lea.vmem [#allocation3], 59
    %v438 = vld [vmem:[%s437] ss:$2 sm:$0x1f]
    %s439 = scalar_lea.vmem [#allocation9], 128
    %v440 = vld [vmem:[%s439] sm:$0xff]
    %v441 = vld [vmem:[%s439 + $0x8] sm:$0xff]
    %v442 = vld [vmem:[%s439 + $0x10] sm:$0xff]
    %v443 = vld [vmem:[%s439 + $0x18] sm:$0xff]
    %v444 = vld [vmem:[%s439 + $0x20] sm:$0xff]
    %v445 = vld [vmem:[%s439 + $0x28] sm:$0xff]
    %v446 = vld [vmem:[%s439 + $0x30] sm:$0xff]
    %v447 = vld [vmem:[%s439 + $0x38] sm:$0xff]
    %v448 = vld [vmem:[%s439 + $0x40] sm:$0xff]
    %v449 = vld [vmem:[%s439 + $0x48] sm:$0xff]
    %v450 = vld [vmem:[%s439 + $0x50] sm:$0xff]
    %v451 = vld [vmem:[%s439 + $0x58] sm:$0xff]
    %v452 = vld [vmem:[%s439 + $0x60] sm:$0xff]
    %v453 = vld [vmem:[%s439 + $0x68] sm:$0xff]
    %v454 = vld [vmem:[%s439 + $0x70] sm:$0xff]
    %v455 = vld [vmem:[%s439 + $0x78] sm:$0xff]
    %456 = vmatpush.msra.mxu0 %v455
    %457 = vmatpush.msra.mxu0 %v454
    %458 = vmatpush.msra.mxu0 %v453
    %459 = vmatpush.msra.mxu0 %v452
    %460 = vmatpush.msra.mxu0 %v451
    %461 = vmatpush.msra.mxu0 %v450
    %462 = vmatpush.msra.mxu0 %v449
    %463 = vmatpush.msra.mxu0 %v448
    %464 = vmatpush.msra.mxu0 %v447
    %465 = vmatpush.msra.mxu0 %v446
    %466 = vmatpush.msra.mxu0 %v445
    %467 = vmatpush.msra.mxu0 %v444
    %468 = vmatpush.msra.mxu0 %v443
    %469 = vmatpush.msra.mxu0 %v442
    %470 = vmatpush.msra.mxu0 %v441
    %471 = vmatpush.msra.mxu0 %v440
    %472 = vmatmul.f32.gmra.mxu0 %v432
    %v473 = vpop.f32.mrf.mxu0
    %v474 = vadd.f32 0.0, %v473
    %475 = vmatmul.f32.gmra.mxu0 %v434
    %v476 = vpop.f32.mrf.mxu0
    %v477 = vadd.f32 0.0, %v476
    %478 = vmatmul.f32.gmra.mxu0 %v436
    %v479 = vpop.f32.mrf.mxu0
    %v480 = vadd.f32 0.0, %v479
    %481 = vmatmul.f32.gmra.mxu0 %v438
    %v482 = vpop.f32.mrf.mxu0
    %v483 = vadd.f32 0.0, %v482
    %484 = vdwg.mxu0
    %485 = vmatpush.msra.mxu0 %v430
    %486 = vmatpush.msra.mxu0 %v429
    %487 = vmatpush.msra.mxu0 %v428
    %488 = vmatpush.msra.mxu0 %v427
    %489 = vmatpush.msra.mxu0 %v426
    %490 = vmatpush.msra.mxu0 %v425
    %491 = vmatpush.msra.mxu0 %v424
    %492 = vmatpush.msra.mxu0 %v423
    %493 = vmatpush.msra.mxu0 %v422
    %494 = vmatpush.msra.mxu0 %v421
    %495 = vmatpush.msra.mxu0 %v420
    %496 = vmatpush.msra.mxu0 %v419
    %497 = vmatpush.msra.mxu0 %v418
    %498 = vmatpush.msra.mxu0 %v417
    %499 = vmatpush.msra.mxu0 %v416
    %500 = vmatpush.msra.mxu0 %v415
    %501 = vmatmul.f32.gmra.mxu0 %v408
    %v502 = vpop.f32.mrf.mxu0
    %v503 = vadd.f32 %v474, %v502
    %504 = vmatmul.f32.gmra.mxu0 %v410
    %v505 = vpop.f32.mrf.mxu0
    %v506 = vadd.f32 %v477, %v505
    %507 = vmatmul.f32.gmra.mxu0 %v412
    %v508 = vpop.f32.mrf.mxu0
    %v509 = vadd.f32 %v480, %v508
    %510 = vmatmul.f32.gmra.mxu0 %v414
    %v511 = vpop.f32.mrf.mxu0
    %v512 = vadd.f32 %v483, %v511
    %513 = vdwg.mxu0
    %s514 = scalar_lea.vmem [#allocation3], 15
    %v515 = vld [vmem:[%s514] ss:$2 sm:$0xff]
    %s516 = scalar_lea.vmem [#allocation3], 31
    %v517 = vld [vmem:[%s516] ss:$2 sm:$0xff]
    %s518 = scalar_lea.vmem [#allocation3], 47
    %v519 = vld [vmem:[%s518] ss:$2 sm:$0xff]
    %s520 = scalar_lea.vmem [#allocation3], 63
    %v521 = vld [vmem:[%s520] ss:$2 sm:$0x1f]
    %s522 = scalar_lea.vmem [#allocation9], 256
    %v523 = vld [vmem:[%s522] sm:$0xff]
    %v524 = vld [vmem:[%s522 + $0x8] sm:$0xff]
    %v525 = vld [vmem:[%s522 + $0x10] sm:$0xff]
    %v526 = vld [vmem:[%s522 + $0x18] sm:$0xff]
    %v527 = vld [vmem:[%s522 + $0x20] sm:$0xff]
    %v528 = vld [vmem:[%s522 + $0x28] sm:$0xff]
    %v529 = vld [vmem:[%s522 + $0x30] sm:$0xff]
    %v530 = vld [vmem:[%s522 + $0x38] sm:$0xff]
    %v531 = vld [vmem:[%s522 + $0x40] sm:$0xff]
    %v532 = vld [vmem:[%s522 + $0x48] sm:$0xff]
    %v533 = vld [vmem:[%s522 + $0x50] sm:$0xff]
    %v534 = vld [vmem:[%s522 + $0x58] sm:$0xff]
    %v535 = vld [vmem:[%s522 + $0x60] sm:$0xff]
    %v536 = vld [vmem:[%s522 + $0x68] sm:$0xff]
    %v537 = vld [vmem:[%s522 + $0x70] sm:$0xff]
    %v538 = vld [vmem:[%s522 + $0x78] sm:$0xff]
    %539 = vmatpush.msra.mxu0 %v538
    %540 = vmatpush.msra.mxu0 %v537
    %541 = vmatpush.msra.mxu0 %v536
    %542 = vmatpush.msra.mxu0 %v535
    %543 = vmatpush.msra.mxu0 %v534
    %544 = vmatpush.msra.mxu0 %v533
    %545 = vmatpush.msra.mxu0 %v532
    %546 = vmatpush.msra.mxu0 %v531
    %547 = vmatpush.msra.mxu0 %v530
    %548 = vmatpush.msra.mxu0 %v529
    %549 = vmatpush.msra.mxu0 %v528
    %550 = vmatpush.msra.mxu0 %v527
    %551 = vmatpush.msra.mxu0 %v526
    %552 = vmatpush.msra.mxu0 %v525
    %553 = vmatpush.msra.mxu0 %v524
    %554 = vmatpush.msra.mxu0 %v523
    %555 = vmatmul.f32.gmra.mxu0 %v515
    %v556 = vpop.f32.mrf.mxu0
    %v557 = vadd.f32 0.0, %v556
    %558 = vmatmul.f32.gmra.mxu0 %v517
    %v559 = vpop.f32.mrf.mxu0
    %v560 = vadd.f32 0.0, %v559
    %561 = vmatmul.f32.gmra.mxu0 %v519
    %v562 = vpop.f32.mrf.mxu0
    %v563 = vadd.f32 0.0, %v562
    %564 = vmatmul.f32.gmra.mxu0 %v521
    %v565 = vpop.f32.mrf.mxu0
    %v566 = vadd.f32 0.0, %v565
    %567 = vdwg.mxu0
    %v568 = vadd.f32 %v503, %v557
    %v569 = vadd.f32 %v506, %v560
    %v570 = vadd.f32 %v509, %v563
    %v571 = vadd.f32 %v512, %v566
    %v573 = vperm.slane %v406, 0
    %v575 = vadd.f32 %v568, %v573
    %v576 = vadd.f32 %v569, %v573
    %v577 = vadd.f32 %v570, %v573
    %v578 = vadd.f32 %v571, %v573
    %vm579 = vcmp.ge.f32.partialorder %v575, 0.0
    %vm580 = vcmp.ge.f32.partialorder %v576, 0.0
    %vm581 = vcmp.ge.f32.partialorder %v577, 0.0
    %vm582 = vcmp.ge.f32.partialorder %v578, 0.0
    %v583 = vmul.f32 %v575, 0.01
    %v584 = vmul.f32 %v576, 0.01
    %v585 = vmul.f32 %v577, 0.01
    %v586 = vmul.f32 %v578, 0.01
    %v587 = vsel %vm579, %v575, %v583
    %v588 = vsel %vm580, %v576, %v584
    %v589 = vsel %vm581, %v577, %v585
    %v590 = vsel %vm582, %v578, %v586
    %591 = vst [vmem:[#allocation4] sm:$0xff] %v587
    %592 = vst [vmem:[#allocation4 + $0x8] sm:$0xff] %v588
    %593 = vst [vmem:[#allocation4 + $0x10] sm:$0xff] %v589
    %594 = vst [vmem:[#allocation4 + $0x18] sm:$0x1] %v590
    %v595 = vld [vmem:[#allocation4] ss:$5 sm:$0x1f]
    %s596 = scalar_lea.vmem [#allocation4], 1
    %v597 = vld [vmem:[%s596] ss:$5 sm:$0x1f]
    %v598 = vmax.f32 %v595, %v597
    %s599 = scalar_lea.vmem [#allocation4], 2
    %v600 = vld [vmem:[%s599] ss:$5 sm:$0x1f]
    %v601 = vmax.f32 %v598, %v600
    %s602 = scalar_lea.vmem [#allocation4], 3
    %v603 = vld [vmem:[%s602] ss:$5 sm:$0x1f]
    %v604 = vmax.f32 %v601, %v603
    %s605 = scalar_lea.vmem [#allocation4], 4
    %v606 = vld [vmem:[%s605] ss:$5 sm:$0x1f]
    %v607 = vmax.f32 %v604, %v606
    %608 = vst [vmem:[%s5] sm:$0x1f] %v607
    // Predicated region
    $region34: #{tpu_custom_call.1} parent=1 // pred_check
      _
    $region35: #{tpu_custom_call.1} parent=1 // pred_check_branch
      %610 = sbr.rel (0) target = $region37
    $region36: #{tpu_custom_call.1} parent=1 // pred_region
      _
    $region37: #{tpu_custom_call.1} parent=1 // pred_fallthru
      _
    // Predicated region
    $region38: #{tpu_custom_call.1} parent=1 // pred_check
      _
    $region39: #{tpu_custom_call.1} parent=1 // pred_check_branch
      %612 = sbr.rel (0) target = $region41
    $region40: #{tpu_custom_call.1} parent=1 // pred_region
      _
    $region41: #{tpu_custom_call.1} parent=1 // pred_fallthru
      _
    %613 = vsyncpa [#allocation6], 1
    %614 = vsyncpa [#allocation8], 1

</llo_original>
